<compile_context>
chip_gen: v7x
topology: tpu7x:2x2x1
jax: 0.10.0
libtpu: 0.0.40
codegen_flags: <defaults>
</compile_context>

<pallas_src>
import functools

import jax
import jax.numpy as jnp
from jax.experimental import pallas as pl
from jax.experimental.pallas import tpu as pltpu

_COS_EPS = 1e-8    # F.cosine_similarity default eps
_NORM_EPS = 1e-12  # F.normalize default eps


def _round_up(x, m):
    return (x + m - 1) // m * m


def _default_vmem_limit_bytes():
    # Generation-aware VMEM budget: ~75% of physical (96 MiB on v5e/v6e with
    # 128 MiB, 48 MiB on v7x with 64 MiB). Conservative fallback if the query
    # is unavailable.
    try:
        cap = int(pltpu.get_tpu_info().vmem_capacity_bytes)
    except Exception:
        cap = 64 * 1024 * 1024
    return (cap * 3) // 4


def _pick_block_rows(m, h, g_pad, n_split, emb_itemsize, budget_bytes):
    # Resident VMEM that does not scale with block_rows:
    #   * three partial-output blocks (double-buffered): 2*(2*G*H + G)*4 B
    #   * the untiled idx block (assume double-buffered): ~2*M_pad*4 B
    out_resident = 2 * (2 * g_pad * h + g_pad) * 4
    idx_resident = 2 * (_round_up(m, 128 * n_split) + 128 * n_split) * 4
    avail = max(budget_bytes - out_resident - idx_resident, 0)
    # Per-row bytes per grid step: double-buffered emb tile (input dtype),
    # f32 cast + normalized copy + squared temp, and one onehot column.
    per_row = 2 * h * emb_itemsize + 3 * h * 4 + g_pad * 4 + 32
    cap_rows = max(avail // per_row, 128)
    rows_per_split = _round_up(-(-m // n_split), 128)
    bm = min(cap_rows, 32768, rows_per_split)
    bm = max((bm // 128) * 128, 128)
    return int(bm)


def _mean_sim_accum_kernel(idx_ref, emb_ref, s_ref, shat_ref, cnt_ref, *,
                           block_rows, g_pad, n_inner, rows_total, needs_mask):
    i = pl.program_id(1)

    @pl.when(i == 0)
    def _init():
        s_ref[...] = jnp.zeros_like(s_ref)
        shat_ref[...] = jnp.zeros_like(shat_ref)
        cnt_ref[...] = jnp.zeros_like(cnt_ref)

    c = pl.program_id(0)
    bm = block_rows
    row0 = (c * n_inner + i) * bm          # global (unclamped) row offset

    # Cast after the DMA: bf16 (or other) inputs stream at native width.
    ef = emb_ref[...].astype(jnp.float32)  # (bm, H)

    if needs_mask:
        # Zero rows past the true M (partial / duplicated edge tiles may hold
        # garbage that would otherwise poison the matmuls with NaN/Inf).
        rid = jax.lax.broadcasted_iota(jnp.int32, (bm, 1), 0) + row0
        ef = jnp.where(rid < rows_total, ef, 0.0)

    # Slice this tile's ids out of the untiled (1, M_pad) idx block.
    start = pl.multiple_of(row0, 128)
    idx = idx_ref[:, pl.ds(start, bm)]      # (1, bm) int32; pad rows are -1

    # One-hot group membership, (G_pad, bm). Rows with idx == -1 (invalid or
    # pad) match no group and therefore contribute nothing to any accumulator.
    gid = jax.lax.broadcasted_iota(jnp.int32, (g_pad, bm), 0)
    onehot = (gid == idx).astype(jnp.float32)

    # Row-normalized embeddings; rsqrt goes to the EUP (otherwise idle slot).
    # rsqrt(max(sq, eps^2)) == 1 / max(||e||, eps) (torch cosine_similarity
    # clamp, applied per operand).
    sq = jnp.sum(ef * ef, axis=1, keepdims=True)                    # (bm, 1)
    inv = jax.lax.rsqrt(jnp.maximum(sq, _COS_EPS * _COS_EPS))       # (bm, 1)
    e_hat = ef * inv                                                 # (bm, H)

    # MXU segment sums + per-group counts, accumulated into the resident
    # per-split output blocks.
    s_ref[...] += jnp.dot(onehot, ef, preferred_element_type=jnp.float32)
    shat_ref[...] += jnp.dot(onehot, e_hat, preferred_element_type=jnp.float32)
    cnt_ref[...] += jnp.sum(onehot, axis=1, keepdims=True)           # (G_pad,1)


def mean_similarity_loss(embeddings, flatten_idx, num_ids, *,
                         block_rows=None, n_split=2, vmem_limit_bytes=None):
    """Pallas TPU MeanSimilarityLoss.

    embeddings : (M, H) float array (f32 or bf16; streamed at native width).
    flatten_idx: (M,) int array with values in {-1} ∪ [0, num_ids); every id in
                 [0, num_ids) is assumed to occur at least once (static-shape
                 stand-in for torch.unique()).
    Returns (avg_dis, mean_dis, counts[num_ids]).
    """
    m, h = embeddings.shape
    assert flatten_idx.shape == (m,)
    g = int(num_ids)
    g_pad = _round_up(max(g, 1), 8)
    n_split = max(int(n_split), 1)

    if vmem_limit_bytes is None:
        vmem_limit_bytes = _default_vmem_limit_bytes()
    vmem_limit_bytes = int(vmem_limit_bytes)

    emb_itemsize = jnp.dtype(embeddings.dtype).itemsize
    if block_rows is None:
        block_rows = _pick_block_rows(m, h, g_pad, n_split, emb_itemsize,
                                      budget_bytes=vmem_limit_bytes)
    bm = int(block_rows)

    n_inner = max(-(-m // (n_split * bm)), 1)
    m_pad = n_split * n_inner * bm
    last_tile = max(-(-m // bm) - 1, 0)     # last tile that touches real data
    needs_mask = (m_pad != m)

    # Only the (tiny) idx array is padded; the embeddings are streamed as-is
    # and ragged tail rows are masked inside the kernel.
    idx = flatten_idx.astype(jnp.int32)
    if m_pad != m:
        idx = jnp.pad(idx, (0, m_pad - m), constant_values=-1)
    idx2d = idx.reshape(1, m_pad)

    kernel = functools.partial(
        _mean_sim_accum_kernel, block_rows=bm, g_pad=g_pad, n_inner=n_inner,
        rows_total=m, needs_mask=needs_mask)

    s_parts, shat_parts, cnt_parts = pl.pallas_call(
        kernel,
        out_shape=(
            jax.ShapeDtypeStruct((n_split * g_pad, h), jnp.float32),  # sums
            jax.ShapeDtypeStruct((n_split * g_pad, h), jnp.float32),  # norm sums
            jax.ShapeDtypeStruct((n_split * g_pad, 1), jnp.float32),  # counts
        ),
        grid_spec=pltpu.PrefetchScalarGridSpec(
            num_scalar_prefetch=0,
            grid=(n_split, n_inner),
            in_specs=[
                # idx: single untiled VMEM block, constant index map.
                pl.BlockSpec((1, m_pad), lambda c, i: (0, 0)),
                # emb: clamp so a fully-out-of-range tile re-reads the last
                # real tile (its contribution is masked to zero in-kernel).
                pl.BlockSpec(
                    (bm, h),
                    lambda c, i: (jnp.minimum(c * n_inner + i, last_tile), 0)),
            ],
            out_specs=[
                pl.BlockSpec((g_pad, h), lambda c, i: (c, 0)),
                pl.BlockSpec((g_pad, h), lambda c, i: (c, 0)),
                pl.BlockSpec((g_pad, 1), lambda c, i: (c, 0)),
            ],
        ),
        compiler_params=pltpu.CompilerParams(
            dimension_semantics=("parallel", "arbitrary"),
            vmem_limit_bytes=vmem_limit_bytes,
        ),
    )(idx2d, embeddings)

    # ---- tiny finalize on (G, H) data (merge splits, means, two scalars) ----
    s = s_parts.reshape(n_split, g_pad, h).sum(axis=0)[:g]       # (G, H)
    shat = shat_parts.reshape(n_split, g_pad, h).sum(axis=0)[:g]  # (G, H)
    cnt = cnt_parts.reshape(n_split, g_pad).sum(axis=0)[:g]       # (G,)

    cnt_safe = jnp.maximum(cnt, 1.0)          # guard: empty group -> no NaN
    means = s / cnt_safe[:, None]
    m_norm = jnp.sqrt(jnp.sum(means * means, axis=1, keepdims=True))

    # avg_dis = sum_{i valid} (1 - cos(e_i, mean_{g(i)})) / (n_valid + 1e-9)
    m_hat = means / jnp.maximum(m_norm, _COS_EPS)
    cos_sum = jnp.sum(shat * m_hat)
    n_valid = jnp.sum(cnt)
    avg_dis = (n_valid - cos_sum) / (n_valid + 1e-9)

    # mean_reg: mean off-diagonal cosine similarity of the group means.
    m_n = means / jnp.maximum(m_norm, _NORM_EPS)
    cos_sim = m_n @ m_n.T
    off_sum = jnp.sum(cos_sim) - jnp.sum(m_n * m_n)   # total - trace
    mean_dis = off_sum / (float(g * g - g) + 1e-9)

    return avg_dis, mean_dis, cnt


def mean_similarity_loss_ref(embeddings, flatten_idx, num_ids):
    """Pure-JAX reference matching the PyTorch module's forward."""
    e = embeddings.astype(jnp.float32)
    idx = flatten_idx.astype(jnp.int32)
    g = int(num_ids)

    valid = (idx != -1).astype(jnp.float32)
    onehot = (idx[:, None] == jnp.arange(g)[None, :]).astype(jnp.float32)  # (M,G)
    counts = onehot.sum(axis=0)                                            # (G,)
    sums = onehot.T @ e
    means = sums / counts[:, None]
    means_exp = onehot @ means           # rows with idx == -1 stay zero

    def _norm(x):
        return jnp.sqrt(jnp.sum(x * x, axis=1, keepdims=True))

    e_hat = e / jnp.maximum(_norm(e), _COS_EPS)
    m_hat = means_exp / jnp.maximum(_norm(means_exp), _COS_EPS)
    cos = jnp.sum(e_hat * m_hat, axis=1)
    avg_dis = jnp.sum((1.0 - cos) * valid) / (jnp.sum(valid) + 1e-9)

    m_n = means / jnp.maximum(_norm(means), _NORM_EPS)
    cos_sim = m_n @ m_n.T
    off = jnp.sum(cos_sim) - jnp.trace(cos_sim)
    mean_dis = off / (float(g * g - g) + 1e-9)
    return avg_dis, mean_dis, counts


if __name__ == "__main__":
    key = jax.random.PRNGKey(0)
    k1, k2, k3 = jax.random.split(key, 3)

    # Small shapes consistent with the module: batch=2 x seq=128 -> M=256
    # flattened instances, hidden=32, num_ids=8 groups.
    M, H, G = 256, 32, 8
    embeddings = jax.random.normal(k1, (M, H), dtype=jnp.float32)
    flatten_idx = jax.random.randint(k2, (M,), 0, G, dtype=jnp.int32)
    # Mark ~20% of entries invalid, but keep one guaranteed member per group so
    # every id in [0, G) occurs (static-shape stand-in for torch.unique()).
    drop = jax.random.bernoulli(k3, 0.2, (M,))
    flatten_idx = jnp.where(drop, -1, flatten_idx)
    flatten_idx = flatten_idx.at[:G].set(jnp.arange(G, dtype=jnp.int32))

    avg_dis, mean_dis, counts = mean_similarity_loss(embeddings, flatten_idx, G)
    avg_dis, mean_dis, counts = jax.block_until_ready((avg_dis, mean_dis, counts))

    ref_avg, ref_mean, ref_counts = mean_similarity_loss_ref(
        embeddings, flatten_idx, G)
    assert jnp.allclose(avg_dis, ref_avg, rtol=1e-3, atol=1e-3), (avg_dis, ref_avg)
    assert jnp.allclose(mean_dis, ref_mean, rtol=1e-3, atol=1e-3), (mean_dis, ref_mean)
    assert jnp.allclose(counts, ref_counts, rtol=0, atol=0.5), (counts, ref_counts)

    print("KERNEL_OK")
</pallas_src>

<mosaic_0001>
module attributes {stable_mosaic.version = 11 : i64} {
  func.func @_mean_sim_accum_kernel(%arg0: i32, %arg1: i32, %arg2: memref<1x256xi32, #tpu.memory_space<vmem>>, %arg3: memref<128x32xf32, #tpu.memory_space<vmem>>, %arg4: memref<8x32xf32, #tpu.memory_space<vmem>>, %arg5: memref<8x32xf32, #tpu.memory_space<vmem>>, %arg6: memref<8x1xf32, #tpu.memory_space<vmem>>) attributes {dimension_semantics = [#tpu.dimension_semantics<parallel>, #tpu.dimension_semantics<arbitrary>], iteration_bounds = array<i64: 2, 1>, scalar_prefetch = 0 : i64, scratch_operands = 0 : i64, tpu.core_type = #tpu.core_type<tc>, window_params = [{pipeline_mode = #tpu.pipeline_mode<synchronous>, transform_indices = @transform_0, window_bounds = array<i64: 1, 256>}, {transform_indices = @transform_1, window_bounds = array<i64: 128, 32>}, {transform_indices = @transform_2, window_bounds = array<i64: 8, 32>}, {transform_indices = @transform_3, window_bounds = array<i64: 8, 32>}, {transform_indices = @transform_4, window_bounds = array<i64: 8, 1>}]} {
    %c0_i32 = arith.constant 0 : i32
    %0 = arith.cmpi eq, %arg1, %c0_i32 : i32
    %1 = arith.extui %0 : i1 to i32
    %c0_i32_0 = arith.constant 0 : i32
    %2 = arith.cmpi ne, %1, %c0_i32_0 : i32
    scf.if %2 {
      %cst_19 = arith.constant 0.000000e+00 : f32
      %36 = vector.broadcast %cst_19 : f32 to vector<8x32xf32>
      %c0_20 = arith.constant 0 : index
      %c0_21 = arith.constant 0 : index
      %37 = vector.load %arg4[%c0_20, %c0_21] : memref<8x32xf32, #tpu.memory_space<vmem>>, vector<8x32xf32>
      tpu.vector_store %arg4[%c0_20, %c0_21], %36 {strides = array<i32>} : memref<8x32xf32, #tpu.memory_space<vmem>>, vector<8x32xf32>,
      %cst_22 = arith.constant 0.000000e+00 : f32
      %38 = vector.broadcast %cst_22 : f32 to vector<8x32xf32>
      %c0_23 = arith.constant 0 : index
      %c0_24 = arith.constant 0 : index
      %39 = vector.load %arg5[%c0_23, %c0_24] : memref<8x32xf32, #tpu.memory_space<vmem>>, vector<8x32xf32>
      tpu.vector_store %arg5[%c0_23, %c0_24], %38 {strides = array<i32>} : memref<8x32xf32, #tpu.memory_space<vmem>>, vector<8x32xf32>,
      %cst_25 = arith.constant 0.000000e+00 : f32
      %40 = vector.broadcast %cst_25 : f32 to vector<8x1xf32>
      %c0_26 = arith.constant 0 : index
      %c0_27 = arith.constant 0 : index
      %41 = vector.load %arg6[%c0_26, %c0_27] : memref<8x1xf32, #tpu.memory_space<vmem>>, vector<8x1xf32>
      tpu.vector_store %arg6[%c0_26, %c0_27], %40 {strides = array<i32>} : memref<8x1xf32, #tpu.memory_space<vmem>>, vector<8x1xf32>,
    } else {
    }
    %c1_i32 = arith.constant 1 : i32
    %3 = arith.muli %arg0, %c1_i32 : i32
    %4 = arith.addi %3, %arg1 : i32
    %c128_i32 = arith.constant 128 : i32
    %5 = arith.muli %4, %c128_i32 : i32
    %c0 = arith.constant 0 : index
    %c0_1 = arith.constant 0 : index
    %6 = vector.load %arg3[%c0, %c0_1] : memref<128x32xf32, #tpu.memory_space<vmem>>, vector<128x32xf32>
    %7 = tpu.assume_multiple %5, 128 : i32
    %c0_2 = arith.constant 0 : index
    %8 = arith.index_cast %7 : i32 to index
    %9 = vector.load %arg2[%c0_2, %8] : memref<1x256xi32, #tpu.memory_space<vmem>>, vector<1x128xi32>
    %10 = tpu.iota {dimensions = array<i32: 0>} : vector<8x128xi32>
    %11 = vector.broadcast %9 : vector<1x128xi32> to vector<8x128xi32>
    %12 = arith.cmpi eq, %10, %11 : vector<8x128xi32>
    %13 = arith.extui %12 : vector<8x128xi1> to vector<8x128xi32>
    %14 = arith.sitofp %13 : vector<8x128xi32> to vector<8x128xf32>
    %15 = arith.mulf %6, %6 : vector<128x32xf32>
    %cst = arith.constant dense<0.000000e+00> : vector<128xf32>
    %16 = vector.multi_reduction <add>, %15, %cst [1] : vector<128x32xf32> to vector<128xf32>
    %17 = vector.shape_cast %16 : vector<128xf32> to vector<128x1xf32>
    %cst_3 = arith.constant 1.000000e-16 : f32
    %18 = vector.broadcast %cst_3 : f32 to vector<128x1xf32>
    %19 = arith.maximumf %17, %18 : vector<128x1xf32>
    %20 = math.rsqrt %19 : vector<128x1xf32>
    %21 = vector.broadcast %20 : vector<128x1xf32> to vector<128x32xf32>
    %22 = arith.mulf %6, %21 : vector<128x32xf32>
    %c0_4 = arith.constant 0 : index
    %c0_5 = arith.constant 0 : index
    %23 = vector.load %arg4[%c0_4, %c0_5] : memref<8x32xf32, #tpu.memory_space<vmem>>, vector<8x32xf32>
    %cst_6 = arith.constant dense<0.000000e+00> : vector<8x32xf32>
    %24 = tpu.matmul %14, %6, %cst_6 {dimension_numbers = #tpu.dot_dimension_numbers<[1], [0], [0], [1], [0, 0, 1, 1], [], []>} : vector<8x128xf32>, vector<128x32xf32>, vector<8x32xf32> -> vector<8x32xf32>
    %25 = arith.addf %23, %24 : vector<8x32xf32>
    %c0_7 = arith.constant 0 : index
    %c0_8 = arith.constant 0 : index
    %26 = vector.load %arg4[%c0_7, %c0_8] : memref<8x32xf32, #tpu.memory_space<vmem>>, vector<8x32xf32>
    tpu.vector_store %arg4[%c0_7, %c0_8], %25 {strides = array<i32>} : memref<8x32xf32, #tpu.memory_space<vmem>>, vector<8x32xf32>,
    %c0_9 = arith.constant 0 : index
    %c0_10 = arith.constant 0 : index
    %27 = vector.load %arg5[%c0_9, %c0_10] : memref<8x32xf32, #tpu.memory_space<vmem>>, vector<8x32xf32>
    %cst_11 = arith.constant dense<0.000000e+00> : vector<8x32xf32>
    %28 = tpu.matmul %14, %22, %cst_11 {dimension_numbers = #tpu.dot_dimension_numbers<[1], [0], [0], [1], [0, 0, 1, 1], [], []>} : vector<8x128xf32>, vector<128x32xf32>, vector<8x32xf32> -> vector<8x32xf32>
    %29 = arith.addf %27, %28 : vector<8x32xf32>
    %c0_12 = arith.constant 0 : index
    %c0_13 = arith.constant 0 : index
    %30 = vector.load %arg5[%c0_12, %c0_13] : memref<8x32xf32, #tpu.memory_space<vmem>>, vector<8x32xf32>
    tpu.vector_store %arg5[%c0_12, %c0_13], %29 {strides = array<i32>} : memref<8x32xf32, #tpu.memory_space<vmem>>, vector<8x32xf32>,
    %c0_14 = arith.constant 0 : index
    %c0_15 = arith.constant 0 : index
    %31 = vector.load %arg6[%c0_14, %c0_15] : memref<8x1xf32, #tpu.memory_space<vmem>>, vector<8x1xf32>
    %cst_16 = arith.constant dense<0.000000e+00> : vector<8xf32>
    %32 = vector.multi_reduction <add>, %14, %cst_16 [1] : vector<8x128xf32> to vector<8xf32>
    %33 = vector.shape_cast %32 : vector<8xf32> to vector<8x1xf32>
    %34 = arith.addf %31, %33 : vector<8x1xf32>
    %c0_17 = arith.constant 0 : index
    %c0_18 = arith.constant 0 : index
    %35 = vector.load %arg6[%c0_17, %c0_18] : memref<8x1xf32, #tpu.memory_space<vmem>>, vector<8x1xf32>
    tpu.vector_store %arg6[%c0_17, %c0_18], %34 {strides = array<i32>} : memref<8x1xf32, #tpu.memory_space<vmem>>, vector<8x1xf32>,
    return
  }
  func.func @transform_0(%arg0: i32, %arg1: i32) -> (i32, i32) {
    %c0_i32 = arith.constant 0 : i32
    %c0_i32_0 = arith.constant 0 : i32
    %c0_i32_1 = arith.constant 0 : i32
    return %c0_i32, %c0_i32_0 : i32, i32
  }
  func.func @transform_1(%arg0: i32, %arg1: i32) -> (i32, i32) {
    %c1_i32 = arith.constant 1 : i32
    %0 = arith.muli %arg0, %c1_i32 : i32
    %1 = arith.addi %0, %arg1 : i32
    %c1_i32_0 = arith.constant 1 : i32
    %2 = arith.minsi %1, %c1_i32_0 : i32
    %c0_i32 = arith.constant 0 : i32
    %c0_i32_1 = arith.constant 0 : i32
    return %2, %c0_i32 : i32, i32
  }
  func.func @transform_2(%arg0: i32, %arg1: i32) -> (i32, i32) {
    %c0_i32 = arith.constant 0 : i32
    %c0_i32_0 = arith.constant 0 : i32
    return %arg0, %c0_i32 : i32, i32
  }
  func.func @transform_3(%arg0: i32, %arg1: i32) -> (i32, i32) {
    %c0_i32 = arith.constant 0 : i32
    %c0_i32_0 = arith.constant 0 : i32
    return %arg0, %c0_i32 : i32, i32
  }
  func.func @transform_4(%arg0: i32, %arg1: i32) -> (i32, i32) {
    %c0_i32 = arith.constant 0 : i32
    %c0_i32_0 = arith.constant 0 : i32
    return %arg0, %c0_i32 : i32, i32
  }
}

</mosaic_0001>

<llo_original>
// kernel: tpu_custom_call.1
$region0: #{tpu_custom_call.1}
  #allocation0 [shape = 'u32[]', space=smem, size = 0x4, offset = 0x4, fixed_abs, tag = 'smem constant byte address 0x4 - core index']
  #allocation1 [shape = 'u32[144,128]{1,0:T(1,128)}', space=vmem, size = 0x12000, scoped, tag = 'internal scratch']
  %s0 = inlined_call_operand.vmem [shape: s32[1,256], index: 0, kind: input, shape index: {}]
  %s1 = inlined_call_operand.vmem [shape: f32[256,32], index: 1, kind: input, shape index: {}]
  %s2 = inlined_call_operand.hbm [shape: f32[16,32], index: 2, kind: output, shape index: {0}]
  %s3 = inlined_call_operand.hbm [shape: f32[16,32], index: 3, kind: output, shape index: {1}]
  %s4 = inlined_call_operand.vmem [shape: f32[16,1], index: 4, kind: output, shape index: {2}]
  %5 = xla_tuple %s2, %s3, %s4
  %s6 = sld [smem:[#allocation0]]
  $region61: #{tpu_custom_call.1} parent=0
    _
  %s8 = ssub.s32 1, %s6
  %s9 = scalar_select 0, %s8, %s6
  $region1: #{tpu_custom_call.1} parent=0
    #allocation2 [shape = 'u8[8192]{0}', space=vmem, size = 0x2000, scoped, tag = 'output window, operand 0']
    #allocation3 [shape = 's32[2]{0}', space=sflag, size = 0x8, scoped, tag = 'scoped memory for tpu_custom_call.1']
    #allocation4 [shape = 'u8[8192]{0}', space=vmem, size = 0x2000, scoped, tag = 'output window, operand 1']
    #allocation5 [shape = 's32[2]{0}', space=sflag, size = 0x8, scoped, tag = 'scoped memory for tpu_custom_call.1']
    %10 = vsyncpa [#allocation3], 0
    %s11 = scalar_lea.sflag [#allocation3], 1
    %12 = vsyncpa %s11, 0
    %13 = vsyncpa [#allocation5], 0
    %s14 = scalar_lea.sflag [#allocation5], 1
    %15 = vsyncpa %s14, 0
    loop: start=0, step=1, limit=4
    $region2: #{tpu_custom_call.1} parent=1 // loop_pre_header
      _
    $region3: #{tpu_custom_call.1} parent=1 // loop_header
      %s17 = sphi 0, %s21
      %p18 = scmp.ge.s32.totalorder %s17, 4
      %s24 = sphi 0, %s36
      %s25 = sphi 0, %s32
      %s26 = sphi 0, %s24
      %s27 = sphi 0, %s25
      %s28 = sphi 0, %s26
      %s29 = sphi 0, %s27
      %s37 = sphi 0, %s37
      %s39 = sphi 0, %s37
      %s40 = sphi 0, %s39
      %s54 = sphi 0, %s40
      %s66 = sphi 0, %s68
      %s69 = sphi 0, %s66
      %s70 = sphi 0, %s69
      %s86 = sphi 0, %s70
      %s92 = sphi 0, %s94
      %s95 = sphi 0, %s92
      %s96 = sphi 0, %s95
      %s112 = sphi 0, %s96
      %s118 = sphi 0, %s120
      %s121 = sphi 0, %s118
      %s122 = sphi 0, %s121
      %s138 = sphi 0, %s122
      %s144 = sphi 0, %s146
      %s147 = sphi 0, %s144
      %s148 = sphi 0, %s147
      %s164 = sphi 0, %s148
    $region4: #{tpu_custom_call.1} parent=1 // loop_header_branch
      %20 = sbr.rel (%p18) target = $region8
    $region5: #{tpu_custom_call.1} parent=1 // loop_body
      %s22 = ssub.s32 %s17, 1
      %s23 = ssub.s32 %s17, 2
      %s30 = sadd.s32 1, %s25
      %p31 = scmp.ge.s32.totalorder %s30, 1
      %s32 = scalar_select %p31, 0, %s30
      %s33 = sadd.s32 1, %s24
      %s34 = scalar_select %p31, %s33, %s24
      %p35 = scmp.ge.s32.totalorder %s34, 2
      %s36 = scalar_select %p35, 0, %s34
      %s38 = sadd.s32 %s37, 1
      %p41 = scmp.eq.s32.totalorder %s17, 1
      %p42 = scmp.ne.s32.totalorder %s37, %s39
      %p43 = scmp.eq.s32.totalorder %s17, 0
      %p44 = por %p42, %p43
      %p45 = scmp.ne.s32.totalorder %s37, %s39
      %p46 = scmp.eq.s32.totalorder %s22, 1
      %p47 = por %p45, %p46
      %p48 = scmp.ne.s32.totalorder %s39, %s40
      %p49 = scmp.eq.s32.totalorder %s22, 0
      %p50 = por %p48, %p49
      %p51 = scmp.ne.s32.totalorder %s39, %s40
      %p52 = scmp.eq.s32.totalorder %s23, 1
      %p53 = por %p51, %p52
      %p55 = scmp.ne.s32.totalorder %s40, %s54
      %p56 = scmp.eq.s32.totalorder %s23, 0
      %p57 = por %p55, %p56
      %s58 = sadd.s32 %s24, %s25
      %p59 = scmp.lt.s32.totalorder %s58, 1
      %s60 = scalar_select %p59, %s58, 1
      %s61 = sadd.s32 %s36, %s32
      %p62 = scmp.lt.s32.totalorder %s61, 1
      %s63 = scalar_select %p62, %s61, 1
      %s64 = ssub.s32 %s60, %s63
      %p65 = scmp.eq.s32.totalorder %s64, 0
      %s67 = sadd.s32 %s66, 1
      %s68 = scalar_select %p65, %s66, %s67
      %p71 = pneg %p65
      %p72 = scmp.eq.s32.totalorder %s17, 1
      %p73 = por %p71, %p72
      %p74 = scmp.ne.s32.totalorder %s66, %s69
      %p75 = scmp.eq.s32.totalorder %s17, 0
      %p76 = por %p74, %p75
      %p77 = scmp.ne.s32.totalorder %s66, %s69
      %p78 = scmp.eq.s32.totalorder %s22, 1
      %p79 = por %p77, %p78
      %p80 = scmp.ne.s32.totalorder %s69, %s70
      %p81 = scmp.eq.s32.totalorder %s22, 0
      %p82 = por %p80, %p81
      %p83 = scmp.ne.s32.totalorder %s69, %s70
      %p84 = scmp.eq.s32.totalorder %s23, 1
      %p85 = por %p83, %p84
      %p87 = scmp.ne.s32.totalorder %s70, %s86
      %p88 = scmp.eq.s32.totalorder %s23, 0
      %p89 = por %p87, %p88
      %s90 = ssub.s32 %s24, %s36
      %p91 = scmp.eq.s32.totalorder %s90, 0
      %s93 = sadd.s32 %s92, 1
      %s94 = scalar_select %p91, %s92, %s93
      %p97 = pneg %p91
      %p98 = scmp.eq.s32.totalorder %s17, 1
      %p99 = por %p97, %p98
      %p100 = scmp.ne.s32.totalorder %s92, %s95
      %p101 = scmp.eq.s32.totalorder %s17, 0
      %p102 = por %p100, %p101
      %p103 = scmp.ne.s32.totalorder %s92, %s95
      %p104 = scmp.eq.s32.totalorder %s22, 1
      %p105 = por %p103, %p104
      %p106 = scmp.ne.s32.totalorder %s95, %s96
      %p107 = scmp.eq.s32.totalorder %s22, 0
      %p108 = por %p106, %p107
      %p109 = scmp.ne.s32.totalorder %s95, %s96
      %p110 = scmp.eq.s32.totalorder %s23, 1
      %p111 = por %p109, %p110
      %p113 = scmp.ne.s32.totalorder %s96, %s112
      %p114 = scmp.eq.s32.totalorder %s23, 0
      %p115 = por %p113, %p114
      %s116 = ssub.s32 %s24, %s36
      %p117 = scmp.eq.s32.totalorder %s116, 0
      %s119 = sadd.s32 %s118, 1
      %s120 = scalar_select %p117, %s118, %s119
      %p123 = pneg %p117
      %p124 = scmp.eq.s32.totalorder %s17, 1
      %p125 = por %p123, %p124
      %p126 = scmp.ne.s32.totalorder %s118, %s121
      %p127 = scmp.eq.s32.totalorder %s17, 0
      %p128 = por %p126, %p127
      %p129 = scmp.ne.s32.totalorder %s118, %s121
      %p130 = scmp.eq.s32.totalorder %s22, 1
      %p131 = por %p129, %p130
      %p132 = scmp.ne.s32.totalorder %s121, %s122
      %p133 = scmp.eq.s32.totalorder %s22, 0
      %p134 = por %p132, %p133
      %p135 = scmp.ne.s32.totalorder %s121, %s122
      %p136 = scmp.eq.s32.totalorder %s23, 1
      %p137 = por %p135, %p136
      %p139 = scmp.ne.s32.totalorder %s122, %s138
      %p140 = scmp.eq.s32.totalorder %s23, 0
      %p141 = por %p139, %p140
      %s142 = ssub.s32 %s24, %s36
      %p143 = scmp.eq.s32.totalorder %s142, 0
      %s145 = sadd.s32 %s144, 1
      %s146 = scalar_select %p143, %s144, %s145
      %p149 = pneg %p143
      %p150 = scmp.eq.s32.totalorder %s17, 1
      %p151 = por %p149, %p150
      %p152 = scmp.ne.s32.totalorder %s144, %s147
      %p153 = scmp.eq.s32.totalorder %s17, 0
      %p154 = por %p152, %p153
      %p155 = scmp.ne.s32.totalorder %s144, %s147
      %p156 = scmp.eq.s32.totalorder %s22, 1
      %p157 = por %p155, %p156
      %p158 = scmp.ne.s32.totalorder %s147, %s148
      %p159 = scmp.eq.s32.totalorder %s22, 0
      %p160 = por %p158, %p159
      %p161 = scmp.ne.s32.totalorder %s147, %s148
      %p162 = scmp.eq.s32.totalorder %s23, 1
      %p163 = por %p161, %p162
      %p165 = scmp.ne.s32.totalorder %s148, %s164
      %p166 = scmp.eq.s32.totalorder %s23, 0
      %p167 = por %p165, %p166
      %p168 = scmp.le.s32.totalorder 1, %s17
      %p169 = scmp.lt.s32.totalorder %s17, 3
      %p170 = pnand %p168, %p169
      %p171 = pneg %p170
      // Predicated region
      $region9: #{tpu_custom_call.1} parent=5 // pred_check
        _
      $region10: #{tpu_custom_call.1} parent=5 // pred_check_branch
        %173 = sbr.rel (%p170) target = $region12
      $region11: #{tpu_custom_call.1} parent=5 // pred_region
        %s174 = ssub.s32 %s17, 1
        // Predicated region
        $region13: #{tpu_custom_call.1} parent=11 // pred_check
          %p175 = pneg %p50
        $region14: #{tpu_custom_call.1} parent=11 // pred_check_branch
          %177 = sbr.rel (%p175) target = $region16
        $region15: #{tpu_custom_call.1} parent=11 // pred_region
          _
        $region16: #{tpu_custom_call.1} parent=11 // pred_fallthru
          _
      $region12: #{tpu_custom_call.1} parent=5 // pred_fallthru
        _
      %p178 = scmp.lt.s32.totalorder %s17, 2
      // Predicated region
      $region17: #{tpu_custom_call.1} parent=5 // pred_check
        %p179 = pneg %p178
      $region18: #{tpu_custom_call.1} parent=5 // pred_check_branch
        %181 = sbr.rel (%p179) target = $region20
      $region19: #{tpu_custom_call.1} parent=5 // pred_region
        // Predicated region
        $region21: #{tpu_custom_call.1} parent=19 // pred_check
          %p182 = pneg %p76
        $region22: #{tpu_custom_call.1} parent=19 // pred_check_branch
          %184 = sbr.rel (%p182) target = $region24
        $region23: #{tpu_custom_call.1} parent=19 // pred_region
          %s185 = sadd.s32 %s24, %s25
          %p186 = scmp.lt.s32.totalorder %s185, 1
          %s187 = scalar_select %p186, %s185, 1
          %s188 = smul.u32 16, %s187
          %p189 = scmp.lt.s32.totalorder %s188, 31
          %s190 = scalar_select %p189, %s188, 31
          %s191 = smul.addr %s190, 8
          %s192 = scalar_lea.vmem %s1, %s191
          %s193 = sadd.s32 %s24, %s25
          %p194 = scmp.lt.s32.totalorder %s193, 1
          %s195 = scalar_select %p194, %s193, 1
          %s196 = smul.u32 16, %s195
        $region24: #{tpu_custom_call.1} parent=19 // pred_fallthru
          _
      $region20: #{tpu_custom_call.1} parent=5 // pred_fallthru
        _
      %p197 = scmp.le.s32.totalorder 1, %s17
      %p198 = scmp.lt.s32.totalorder %s17, 3
      %p199 = pnand %p197, %p198
      %p200 = pneg %p199
      // Predicated region
      $region25: #{tpu_custom_call.1} parent=5 // pred_check
        _
      $region26: #{tpu_custom_call.1} parent=5 // pred_check_branch
        %202 = sbr.rel (%p199) target = $region28
      $region27: #{tpu_custom_call.1} parent=5 // pred_region
        %s203 = ssub.s32 %s17, 1
        %p204 = pneg %p50
        %p205 = pneg %p47
        %s206 = sadd.s32 %s26, %s27
        %p207 = scmp.lt.s32.totalorder %s206, 1
        %s208 = scalar_select %p207, %s206, 1
        %s209 = smul.u32 16, %s208
        %p210 = scmp.lt.s32.totalorder %s209, 31
        %s211 = scalar_select %p210, %s209, 31
        %s212 = smul.addr %s211, 8
        %s213 = scalar_lea.vmem %s1, %s212
        %p214 = pneg %p82
        %p215 = pneg %p79
        %p216 = pneg %p108
        %p217 = pneg %p105
        %s218 = sand.u32 %s95, 1
        %s219 = scalar_lea.sflag [#allocation3], %s218
        %s220 = sand.u32 %s95, 1
        %s221 = smul.addr %s220, 8
        %s222 = scalar_lea.vmem [#allocation2], %s221
        %p223 = pneg %p134
        %p224 = pneg %p131
        %s225 = sand.u32 %s121, 1
        %s226 = scalar_lea.sflag [#allocation5], %s225
        %s227 = sand.u32 %s121, 1
        %s228 = smul.addr %s227, 8
        %s229 = scalar_lea.vmem [#allocation4], %s228
        %p230 = pneg %p160
        %p231 = pneg %p157
        %p232 = scmp.lt.s32.totalorder %s26, 1
        %s233 = scalar_select %p232, %s26, 1
        %s234 = smul.addr %s233, 8
        %s235 = scalar_lea.vmem %s4, %s234
        %s236 = sadd.s32 %s26, %s27
        %p237 = scmp.lt.s32.totalorder %s236, 1
        %s238 = scalar_select %p237, %s236, 1
        %s239 = smul.u32 16, %s238
        %p240 = scmp.lt.s32.totalorder %s239, 31
        %s241 = scalar_select %p240, %s239, 31
        %s242 = smul.addr %s241, 8
        %s243 = scalar_lea.vmem %s1, %s242
        %s244 = sadd.s32 %s26, %s27
        %p245 = scmp.lt.s32.totalorder %s244, 1
        %s246 = scalar_select %p245, %s244, 1
        %s247 = smul.u32 16, %s246
        %p248 = scmp.lt.s32.totalorder %s26, 1
        %s249 = scalar_select %p248, %s26, 1
        %s250 = smul.addr %s249, 8
        %s251 = scalar_lea.vmem %s4, %s250
        %p252 = scmp.eq.s32.totalorder %s27, 0
        // Predicated region
        $region29: #{tpu_custom_call.1} parent=27 // pred_check
          %p253 = pneg %p252
        $region30: #{tpu_custom_call.1} parent=27 // pred_check_branch
          %255 = sbr.rel (%p253) target = $region32
        $region31: #{tpu_custom_call.1} parent=27 // pred_region
          %vm256 = vcmask 261120
          %257 = vst.msk [vmem:[%s222] sm:$0xff] %vm256, 0.0
          %258 = vst.msk [vmem:[%s229] sm:$0xff] %vm256, 0.0
          %vm259 = vcmask 7168
          %260 = vst.msk [vmem:[%s251] sm:$0xff] %vm259, 0.0
        $region32: #{tpu_custom_call.1} parent=27 // pred_fallthru
          _
        %s261 = sadd.s32 %s26, %s27
        %s262 = smul.u32 %s261, 128
        %v263 = vld [vmem:[%s243] sm:$0xff]
        %v264 = vld [vmem:[%s243 + $0x8] sm:$0xff]
        %v265 = vld [vmem:[%s243 + $0x10] sm:$0xff]
        %v266 = vld [vmem:[%s243 + $0x18] sm:$0xff]
        %v267 = vld [vmem:[%s243 + $0x20] sm:$0xff]
        %v268 = vld [vmem:[%s243 + $0x28] sm:$0xff]
        %v269 = vld [vmem:[%s243 + $0x30] sm:$0xff]
        %v270 = vld [vmem:[%s243 + $0x38] sm:$0xff]
        %v271 = vld [vmem:[%s243 + $0x40] sm:$0xff]
        %v272 = vld [vmem:[%s243 + $0x48] sm:$0xff]
        %v273 = vld [vmem:[%s243 + $0x50] sm:$0xff]
        %v274 = vld [vmem:[%s243 + $0x58] sm:$0xff]
        %v275 = vld [vmem:[%s243 + $0x60] sm:$0xff]
        %v276 = vld [vmem:[%s243 + $0x68] sm:$0xff]
        %v277 = vld [vmem:[%s243 + $0x70] sm:$0xff]
        %v278 = vld [vmem:[%s243 + $0x78] sm:$0xff]
        %s279 = sshra.s32 %s262, 7
        %s280 = sand.u32 %s262, 127
        %s281 = scalar_lea.vmem %s0, %s279
        %v282 = vld [vmem:[%s281] sm:$0x1]
        %v283 = vlaneseq
        %v284 = vshrl.u32 %v283, 7
        %v285 = vlaneseq
        %v286 = vshrl.u32 %v285, 7
        %v287 = vsub.s32 0, %v286
        %v288 = vrot.slane %v282, %v287
        %vm289 = vcmp.eq.s32.totalorder %v284, %v288
        %v290 = vsel %vm289, 1, 0
        %v291 = vcvt.s32.f32 %v290
        %v292 = vmul.f32 %v263, %v263
        %v293 = vmul.f32 %v264, %v264
        %v294 = vmul.f32 %v265, %v265
        %v295 = vmul.f32 %v266, %v266
        %v296 = vmul.f32 %v267, %v267
        %v297 = vmul.f32 %v268, %v268
        %v298 = vmul.f32 %v269, %v269
        %v299 = vmul.f32 %v270, %v270
        %v300 = vmul.f32 %v271, %v271
        %v301 = vmul.f32 %v272, %v272
        %v302 = vmul.f32 %v273, %v273
        %v303 = vmul.f32 %v274, %v274
        %v304 = vmul.f32 %v275, %v275
        %v305 = vmul.f32 %v276, %v276
        %v306 = vmul.f32 %v277, %v277
        %v307 = vmul.f32 %v278, %v278
        %vm308 = vcmask 261120
        %v309 = vsel %vm308, %v292, 0.0
        %310 = vadd.xlane.f32.xlu0 %v309
        %v311 = vpop.xlane.xlu0 %310
        %v312 = vsel %vm308, %v293, 0.0
        %313 = vadd.xlane.f32.xlu0 %v312
        %v314 = vpop.xlane.xlu0 %313
        %v315 = vsel %vm308, %v294, 0.0
        %316 = vadd.xlane.f32.xlu0 %v315
        %v317 = vpop.xlane.xlu0 %316
        %v318 = vsel %vm308, %v295, 0.0
        %319 = vadd.xlane.f32.xlu0 %v318
        %v320 = vpop.xlane.xlu0 %319
        %v321 = vsel %vm308, %v296, 0.0
        %322 = vadd.xlane.f32.xlu0 %v321
        %v323 = vpop.xlane.xlu0 %322
        %v324 = vsel %vm308, %v297, 0.0
        %325 = vadd.xlane.f32.xlu0 %v324
        %v326 = vpop.xlane.xlu0 %325
        %v327 = vsel %vm308, %v298, 0.0
        %328 = vadd.xlane.f32.xlu0 %v327
        %v329 = vpop.xlane.xlu0 %328
        %v330 = vsel %vm308, %v299, 0.0
        %331 = vadd.xlane.f32.xlu0 %v330
        %v332 = vpop.xlane.xlu0 %331
        %v333 = vsel %vm308, %v300, 0.0
        %334 = vadd.xlane.f32.xlu0 %v333
        %v335 = vpop.xlane.xlu0 %334
        %v336 = vsel %vm308, %v301, 0.0
        %337 = vadd.xlane.f32.xlu0 %v336
        %v338 = vpop.xlane.xlu0 %337
        %v339 = vsel %vm308, %v302, 0.0
        %340 = vadd.xlane.f32.xlu0 %v339
        %v341 = vpop.xlane.xlu0 %340
        %v342 = vsel %vm308, %v303, 0.0
        %343 = vadd.xlane.f32.xlu0 %v342
        %v344 = vpop.xlane.xlu0 %343
        %v345 = vsel %vm308, %v304, 0.0
        %346 = vadd.xlane.f32.xlu0 %v345
        %v347 = vpop.xlane.xlu0 %346
        %v348 = vsel %vm308, %v305, 0.0
        %349 = vadd.xlane.f32.xlu0 %v348
        %v350 = vpop.xlane.xlu0 %349
        %v351 = vsel %vm308, %v306, 0.0
        %352 = vadd.xlane.f32.xlu0 %v351
        %v353 = vpop.xlane.xlu0 %352
        %v354 = vsel %vm308, %v307, 0.0
        %355 = vadd.xlane.f32.xlu0 %v354
        %v356 = vpop.xlane.xlu0 %355
        %v357 = vmax.f32 %v311, 1e-16
        %v358 = vmax.f32 %v314, 1e-16
        %v359 = vmax.f32 %v317, 1e-16
        %v360 = vmax.f32 %v320, 1e-16
        %v361 = vmax.f32 %v323, 1e-16
        %v362 = vmax.f32 %v326, 1e-16
        %v363 = vmax.f32 %v329, 1e-16
        %v364 = vmax.f32 %v332, 1e-16
        %v365 = vmax.f32 %v335, 1e-16
        %v366 = vmax.f32 %v338, 1e-16
        %v367 = vmax.f32 %v341, 1e-16
        %v368 = vmax.f32 %v344, 1e-16
        %v369 = vmax.f32 %v347, 1e-16
        %v370 = vmax.f32 %v350, 1e-16
        %v371 = vmax.f32 %v353, 1e-16
        %v372 = vmax.f32 %v356, 1e-16
        %v373 = vrsqrt.pop %v357
        %v374 = vrsqrt.pop %v358
        %v375 = vrsqrt.pop %v359
        %v376 = vrsqrt.pop %v360
        %v377 = vrsqrt.pop %v361
        %v378 = vrsqrt.pop %v362
        %v379 = vrsqrt.pop %v363
        %v380 = vrsqrt.pop %v364
        %v381 = vrsqrt.pop %v365
        %v382 = vrsqrt.pop %v366
        %v383 = vrsqrt.pop %v367
        %v384 = vrsqrt.pop %v368
        %v385 = vrsqrt.pop %v369
        %v386 = vrsqrt.pop %v370
        %v387 = vrsqrt.pop %v371
        %v388 = vrsqrt.pop %v372
        %v389 = vmul.f32 %v263, %v373
        %v390 = vmul.f32 %v264, %v374
        %v391 = vmul.f32 %v265, %v375
        %v392 = vmul.f32 %v266, %v376
        %v393 = vmul.f32 %v267, %v377
        %v394 = vmul.f32 %v268, %v378
        %v395 = vmul.f32 %v269, %v379
        %v396 = vmul.f32 %v270, %v380
        %v397 = vmul.f32 %v271, %v381
        %v398 = vmul.f32 %v272, %v382
        %v399 = vmul.f32 %v273, %v383
        %v400 = vmul.f32 %v274, %v384
        %v401 = vmul.f32 %v275, %v385
        %v402 = vmul.f32 %v276, %v386
        %v403 = vmul.f32 %v277, %v387
        %v404 = vmul.f32 %v278, %v388
        %v405 = vld [vmem:[%s222] sm:$0xff]
        %406 = vmatprep.subr.mxu0 0.0
        %407 = vmatpush1.msra.mxu0 %v263
        %408 = vmatprep.subr.mxu0 0.0
        %409 = vmatpush1.msra.mxu0 %v264
        %410 = vmatprep.subr.mxu0 0.0
        %411 = vmatpush1.msra.mxu0 %v265
        %412 = vmatprep.subr.mxu0 0.0
        %413 = vmatpush1.msra.mxu0 %v266
        %414 = vmatprep.subr.mxu0 0.0
        %415 = vmatpush1.msra.mxu0 %v267
        %416 = vmatprep.subr.mxu0 0.0
        %417 = vmatpush1.msra.mxu0 %v268
        %418 = vmatprep.subr.mxu0 0.0
        %419 = vmatpush1.msra.mxu0 %v269
        %420 = vmatprep.subr.mxu0 0.0
        %421 = vmatpush1.msra.mxu0 %v270
        %422 = vmatprep.subr.mxu0 0.0
        %423 = vmatpush1.msra.mxu0 %v271
        %424 = vmatprep.subr.mxu0 0.0
        %425 = vmatpush1.msra.mxu0 %v272
        %426 = vmatprep.subr.mxu0 0.0
        %427 = vmatpush1.msra.mxu0 %v273
        %428 = vmatprep.subr.mxu0 0.0
        %429 = vmatpush1.msra.mxu0 %v274
        %430 = vmatprep.subr.mxu0 0.0
        %431 = vmatpush1.msra.mxu0 %v275
        %432 = vmatprep.subr.mxu0 0.0
        %433 = vmatpush1.msra.mxu0 %v276
        %434 = vmatprep.subr.mxu0 0.0
        %435 = vmatpush1.msra.mxu0 %v277
        %436 = vmatprep.subr.mxu0 0.0
        %437 = vmatpush1.msra.mxu0 %v278
        %438 = vmatprep.subr.mxu0 0.0
        %439 = vmatpush1.msra.mxu0 0.0
        %440 = vmatprep.subr.mxu0 0.0
        %441 = vmatpush1.msra.mxu0 0.0
        %442 = vmatprep.subr.mxu0 0.0
        %443 = vmatpush1.msra.mxu0 0.0
        %444 = vmatprep.subr.mxu0 0.0
        %445 = vmatpush1.msra.mxu0 0.0
        %446 = vmatprep.subr.mxu0 0.0
        %447 = vmatpush1.msra.mxu0 0.0
        %448 = vmatprep.subr.mxu0 0.0
        %449 = vmatpush1.msra.mxu0 0.0
        %450 = vmatprep.subr.mxu0 0.0
        %451 = vmatpush1.msra.mxu0 0.0
        %452 = vmatprep.subr.mxu0 0.0
        %453 = vmatpush1.msra.mxu0 0.0
        %454 = vmatprep.subr.mxu0 0.0
        %455 = vmatpush1.msra.mxu0 0.0
        %456 = vmatprep.subr.mxu0 0.0
        %457 = vmatpush1.msra.mxu0 0.0
        %458 = vmatprep.subr.mxu0 0.0
        %459 = vmatpush1.msra.mxu0 0.0
        %460 = vmatprep.subr.mxu0 0.0
        %461 = vmatpush1.msra.mxu0 0.0
        %462 = vmatprep.subr.mxu0 0.0
        %463 = vmatpush1.msra.mxu0 0.0
        %464 = vmatprep.subr.mxu0 0.0
        %465 = vmatpush1.msra.mxu0 0.0
        %466 = vmatprep.subr.mxu0 0.0
        %467 = vmatpush1.msra.mxu0 0.0
        %468 = vmatprep.subr.mxu0 0.0
        %469 = vmatpush1.msra.mxu0 0.0
        %470 = vmatprep.mubr.f32.mxu0 0.0
        %471 = vmatmul.mubr.f32.gmra.mrb[0].mxu0 %v291
        %v472 = vpop.f32.mrb[0].mxu0
        %v473 = vadd.f32 0.0, %v472
        %v474 = vpop.f32.mrb[0].mxu0
        %475 = vdwg.mxu0
        %v476 = vadd.f32 %v405, %v473
        %477 = vst.msk [vmem:[%s222] sm:$0xff] %vm308, %v476
        %v478 = vld [vmem:[%s229] sm:$0xff]
        %479 = vmatprep.subr.mxu0 0.0
        %480 = vmatpush1.msra.mxu0 %v389
        %481 = vmatprep.subr.mxu0 0.0
        %482 = vmatpush1.msra.mxu0 %v390
        %483 = vmatprep.subr.mxu0 0.0
        %484 = vmatpush1.msra.mxu0 %v391
        %485 = vmatprep.subr.mxu0 0.0
        %486 = vmatpush1.msra.mxu0 %v392
        %487 = vmatprep.subr.mxu0 0.0
        %488 = vmatpush1.msra.mxu0 %v393
        %489 = vmatprep.subr.mxu0 0.0
        %490 = vmatpush1.msra.mxu0 %v394
        %491 = vmatprep.subr.mxu0 0.0
        %492 = vmatpush1.msra.mxu0 %v395
        %493 = vmatprep.subr.mxu0 0.0
        %494 = vmatpush1.msra.mxu0 %v396
        %495 = vmatprep.subr.mxu0 0.0
        %496 = vmatpush1.msra.mxu0 %v397
        %497 = vmatprep.subr.mxu0 0.0
        %498 = vmatpush1.msra.mxu0 %v398
        %499 = vmatprep.subr.mxu0 0.0
        %500 = vmatpush1.msra.mxu0 %v399
        %501 = vmatprep.subr.mxu0 0.0
        %502 = vmatpush1.msra.mxu0 %v400
        %503 = vmatprep.subr.mxu0 0.0
        %504 = vmatpush1.msra.mxu0 %v401
        %505 = vmatprep.subr.mxu0 0.0
        %506 = vmatpush1.msra.mxu0 %v402
        %507 = vmatprep.subr.mxu0 0.0
        %508 = vmatpush1.msra.mxu0 %v403
        %509 = vmatprep.subr.mxu0 0.0
        %510 = vmatpush1.msra.mxu0 %v404
        %511 = vmatprep.subr.mxu0 0.0
        %512 = vmatpush1.msra.mxu0 0.0
        %513 = vmatprep.subr.mxu0 0.0
        %514 = vmatpush1.msra.mxu0 0.0
        %515 = vmatprep.subr.mxu0 0.0
        %516 = vmatpush1.msra.mxu0 0.0
        %517 = vmatprep.subr.mxu0 0.0
        %518 = vmatpush1.msra.mxu0 0.0
        %519 = vmatprep.subr.mxu0 0.0
        %520 = vmatpush1.msra.mxu0 0.0
        %521 = vmatprep.subr.mxu0 0.0
        %522 = vmatpush1.msra.mxu0 0.0
        %523 = vmatprep.subr.mxu0 0.0
        %524 = vmatpush1.msra.mxu0 0.0
        %525 = vmatprep.subr.mxu0 0.0
        %526 = vmatpush1.msra.mxu0 0.0
        %527 = vmatprep.subr.mxu0 0.0
        %528 = vmatpush1.msra.mxu0 0.0
        %529 = vmatprep.subr.mxu0 0.0
        %530 = vmatpush1.msra.mxu0 0.0
        %531 = vmatprep.subr.mxu0 0.0
        %532 = vmatpush1.msra.mxu0 0.0
        %533 = vmatprep.subr.mxu0 0.0
        %534 = vmatpush1.msra.mxu0 0.0
        %535 = vmatprep.subr.mxu0 0.0
        %536 = vmatpush1.msra.mxu0 0.0
        %537 = vmatprep.subr.mxu0 0.0
        %538 = vmatpush1.msra.mxu0 0.0
        %539 = vmatprep.subr.mxu0 0.0
        %540 = vmatpush1.msra.mxu0 0.0
        %541 = vmatprep.subr.mxu0 0.0
        %542 = vmatpush1.msra.mxu0 0.0
        %543 = vmatprep.mubr.f32.mxu0 0.0
        %544 = vmatmul.mubr.f32.gmra.mrb[0].mxu0 %v291
        %v545 = vpop.f32.mrb[0].mxu0
        %v546 = vadd.f32 0.0, %v545
        %v547 = vpop.f32.mrb[0].mxu0
        %548 = vdwg.mxu0
        %v549 = vadd.f32 %v478, %v546
        %550 = vst.msk [vmem:[%s229] sm:$0xff] %vm308, %v549
        %v551 = vld [vmem:[%s251] sm:$0xff]
        %552 = vadd.xlane.f32.xlu0 %v291
        %v553 = vpop.xlane.xlu0 %552
        %v554 = vadd.f32 %v551, %v553
        %vm555 = vcmask 7168
        %556 = vst.msk [vmem:[%s251] sm:$0xff] %vm555, %v554
        %s557 = sand.u32 %s95, 1
        %s558 = scalar_lea.sflag [#allocation3], %s557
        %s559 = sand.u32 %s95, 1
        %s560 = smul.addr %s559, 8
        %s561 = scalar_lea.vmem [#allocation2], %s560
        %s562 = sand.u32 %s121, 1
        %s563 = scalar_lea.sflag [#allocation5], %s562
        %s564 = sand.u32 %s121, 1
        %s565 = smul.addr %s564, 8
        %s566 = scalar_lea.vmem [#allocation4], %s565
        %p567 = scmp.lt.s32.totalorder %s26, 1
        %s568 = scalar_select %p567, %s26, 1
        %s569 = smul.addr %s568, 8
        %s570 = scalar_lea.vmem %s4, %s569
        // Predicated region
        $region33: #{tpu_custom_call.1} parent=27 // pred_check
          %p571 = pneg %p105
        $region34: #{tpu_custom_call.1} parent=27 // pred_check_branch
          %573 = sbr.rel (%p571) target = $region36
        $region35: #{tpu_custom_call.1} parent=27 // pred_region
          %s575 = ssub.s32 128, 128
          %576 = vsyncadd %s558, %s575
          %s577 = smul.addr %s26, 128
          %s578 = scalar_lea.hbm %s2, %s577
          %s580 = sshll.u32 %s561, 4
          %s581 = int_to_ptr.vmem [resolvable:$true] %s580
          %583 = dma.vmem_to_hbm [thread:$0]  %s581, 128, %s578, %s558
        $region36: #{tpu_custom_call.1} parent=27 // pred_fallthru
          _
        // Predicated region
        $region37: #{tpu_custom_call.1} parent=27 // pred_check
          %p584 = pneg %p131
        $region38: #{tpu_custom_call.1} parent=27 // pred_check_branch
          %586 = sbr.rel (%p584) target = $region40
        $region39: #{tpu_custom_call.1} parent=27 // pred_region
          %s588 = ssub.s32 128, 128
          %589 = vsyncadd %s563, %s588
          %s590 = smul.addr %s26, 128
          %s591 = scalar_lea.hbm %s3, %s590
          %s593 = sshll.u32 %s566, 4
          %s594 = int_to_ptr.vmem [resolvable:$true] %s593
          %596 = dma.vmem_to_hbm [thread:$0]  %s594, 128, %s591, %s563
        $region40: #{tpu_custom_call.1} parent=27 // pred_fallthru
          _
        // Predicated region
        $region41: #{tpu_custom_call.1} parent=27 // pred_check
          %p597 = pneg %p157
        $region42: #{tpu_custom_call.1} parent=27 // pred_check_branch
          %599 = sbr.rel (%p597) target = $region44
        $region43: #{tpu_custom_call.1} parent=27 // pred_region
          _
        $region44: #{tpu_custom_call.1} parent=27 // pred_fallthru
          _
      $region28: #{tpu_custom_call.1} parent=5 // pred_fallthru
        _
      %p600 = scmp.le.s32.totalorder 2, %s17
      // Predicated region
      $region45: #{tpu_custom_call.1} parent=5 // pred_check
        %p601 = pneg %p600
      $region46: #{tpu_custom_call.1} parent=5 // pred_check_branch
        %603 = sbr.rel (%p601) target = $region48
      $region47: #{tpu_custom_call.1} parent=5 // pred_region
        %s604 = ssub.s32 %s17, 2
        // Predicated region
        $region49: #{tpu_custom_call.1} parent=47 // pred_check
          %p605 = pneg %p111
        $region50: #{tpu_custom_call.1} parent=47 // pred_check_branch
          %607 = sbr.rel (%p605) target = $region52
        $region51: #{tpu_custom_call.1} parent=47 // pred_region
          %s608 = sand.u32 %s96, 1
          %s609 = scalar_lea.sflag [#allocation3], %s608
          %s610 = sand.u32 %s96, 1
          %s611 = smul.addr %s610, 8
          %s612 = scalar_lea.vmem [#allocation2], %s611
          %613 = dma.done %s609, 128
        $region52: #{tpu_custom_call.1} parent=47 // pred_fallthru
          _
        // Predicated region
        $region53: #{tpu_custom_call.1} parent=47 // pred_check
          %p614 = pneg %p137
        $region54: #{tpu_custom_call.1} parent=47 // pred_check_branch
          %616 = sbr.rel (%p614) target = $region56
        $region55: #{tpu_custom_call.1} parent=47 // pred_region
          %s617 = sand.u32 %s122, 1
          %s618 = scalar_lea.sflag [#allocation5], %s617
          %s619 = sand.u32 %s122, 1
          %s620 = smul.addr %s619, 8
          %s621 = scalar_lea.vmem [#allocation4], %s620
          %622 = dma.done %s618, 128
        $region56: #{tpu_custom_call.1} parent=47 // pred_fallthru
          _
        // Predicated region
        $region57: #{tpu_custom_call.1} parent=47 // pred_check
          %p623 = pneg %p163
        $region58: #{tpu_custom_call.1} parent=47 // pred_check_branch
          %625 = sbr.rel (%p623) target = $region60
        $region59: #{tpu_custom_call.1} parent=47 // pred_region
          %p626 = scmp.lt.s32.totalorder %s28, 1
          %s627 = scalar_select %p626, %s28, 1
          %s628 = smul.addr %s627, 8
          %s629 = scalar_lea.vmem %s4, %s628
        $region60: #{tpu_custom_call.1} parent=47 // pred_fallthru
          _
      $region48: #{tpu_custom_call.1} parent=5 // pred_fallthru
        _
    $region6: #{tpu_custom_call.1} parent=1 // loop_footer
      %s21 = sadd.s32 1, %s17
    $region7: #{tpu_custom_call.1} parent=1 // loop_footer_branch
      %16 = sbr.rel target = $region3
    $region8: #{tpu_custom_call.1} parent=1 // loop_exit
      _
    %630 = vsyncpa [#allocation3], 1
    %s631 = scalar_lea.sflag [#allocation3], 1
    %632 = vsyncpa %s631, 1
    %633 = vsyncpa [#allocation5], 1
    %s634 = scalar_lea.sflag [#allocation5], 1
    %635 = vsyncpa %s634, 1

</llo_original>
